<compile_context>
chip_gen: v5e
topology: v5e:2x2
jax: 0.10.0
libtpu: 0.0.40
codegen_flags: <defaults>
</compile_context>

<pallas_src>
import functools

import jax
import jax.numpy as jnp
from jax.experimental import pallas as pl
from jax.experimental.pallas import tpu as pltpu


def _round_up(v, m):
    return (v + m - 1) // m * m


def _cdiv(a, b):
    return -(-a // b)


# ---------------------------------------------------------------------------
# Kernel
# ---------------------------------------------------------------------------
def _adapter_kernel(x_ref, wd_ref, bd_ref, wu_ref, bu_ref, o_ref, *, eps):
    # x_ref: (tm, nx) tile of flattened tokens.
    x32 = x_ref[...].astype(jnp.float32)
    nx = x32.shape[-1]
    inv_n = 1.0 / nx

    # LayerNorm statistics over n_embd, biased variance (PyTorch default).
    # One-pass E[x^2] - E[x]^2 with independent reductions (cheaper on the
    # XLU than the dependent mean -> centered -> var chain).  For very large
    # activation magnitudes this trades a little precision vs. two-pass.
    s1 = jnp.sum(x32, axis=-1, keepdims=True)
    s2 = jnp.sum(x32 * x32, axis=-1, keepdims=True)
    mean = s1 * inv_n
    var = jnp.maximum(s2 * inv_n - mean * mean, 0.0)
    xn = (x32 - mean) * jax.lax.rsqrt(var + eps)
    # (gamma / beta are folded into W_down / b_down at param-prep time.)

    # project_down (nx -> padded bottleneck) + ReLU.  MXU operands in the
    # weight dtype (bf16 by default), f32 accumulation.
    h = jnp.dot(xn.astype(wd_ref.dtype), wd_ref[...],
                preferred_element_type=jnp.float32)
    h = jnp.maximum(h + bd_ref[...], 0.0)

    # project_up (padded bottleneck -> nx).
    y = jnp.dot(h.astype(wu_ref.dtype), wu_ref[...],
                preferred_element_type=jnp.float32)
    y = y + bu_ref[...]

    # Residual in f32, re-reading x at the store so the f32 copy of x does
    # not have to stay live across both matmuls.
    o_ref[...] = (x_ref[...].astype(jnp.float32) + y).astype(o_ref.dtype)


# ---------------------------------------------------------------------------
# VMEM sizing / tile selection (generation aware)
# ---------------------------------------------------------------------------
def _vmem_limits():
    cap = 128 * 1024 * 1024
    try:
        cap = int(pltpu.get_tpu_info().vmem_capacity_bytes)
    except Exception:
        pass  # fall back to the 128 MiB default
    # Leave headroom for Mosaic internal scratch / semaphores: ~3/4 of the
    # physical VMEM, capped at 100 MiB (=> ~96 MiB on v5e/v6e, ~48 MiB on v7x).
    limit = min((cap * 3) // 4, 100 * 1024 * 1024)
    budget = (limit * 3) // 4
    return limit, budget


def _choose_tm(M, nx, bneck_p, x_itemsize, c_itemsize, tm_target, vmem_budget):
    """Largest row tile (multiple of 8) whose working set fits the budget."""
    def est(tm):
        io = 2 * 2 * tm * nx * x_itemsize            # x in + out, double-buffered
        weights = 2 * nx * bneck_p * c_itemsize      # W_down + W_up (single-buffered)
        biases = 4 * (nx + bneck_p)
        temps = tm * nx * (4 + 4 + c_itemsize)       # x32 / y f32 + xn cast
        temps += tm * bneck_p * (4 + c_itemsize)     # h f32 + h cast
        return io + weights + biases + temps

    tm = max(8, min(int(tm_target), _round_up(M, 8)))
    tm = _round_up(tm, 8)
    while tm > 8 and est(tm) > vmem_budget:
        tm = max(8, _round_up(tm // 2, 8))
    return tm


# ---------------------------------------------------------------------------
# Parameter preparation (done once, not per forward call)
# ---------------------------------------------------------------------------
def prepare_adapter_params(p, compute_dtype=jnp.bfloat16):
    """Fold LN affine into the down projection, zero-pad the bottleneck to a
    multiple of 128 (exact: padded columns/rows/bias entries are zero) and
    cast the matmul weights to the MXU operand dtype."""
    nx, bneck = p["w_down"].shape
    bneck_p = _round_up(bneck, 128)

    g = p["ln_g"].astype(jnp.float32)
    beta = p["ln_b"].astype(jnp.float32)
    wd32 = p["w_down"].astype(jnp.float32)

    # LN affine fold (in f32, before the compute-dtype cast):
    #   (xn*g + beta) @ Wd + bd == xn @ (g[:,None]*Wd) + (beta @ Wd + bd)
    wd = g[:, None] * wd32
    bd = beta @ wd32 + p["b_down"].astype(jnp.float32)
    wu = p["w_up"].astype(jnp.float32)
    bu = p["b_up"].astype(jnp.float32)

    if bneck_p != bneck:
        pad = bneck_p - bneck
        wd = jnp.pad(wd, ((0, 0), (0, pad)))
        wu = jnp.pad(wu, ((0, pad), (0, 0)))
        bd = jnp.pad(bd, ((0, pad),))

    return {
        "wd": wd.astype(compute_dtype),          # (nx, bneck_p)
        "bd": bd.reshape(1, bneck_p),            # f32
        "wu": wu.astype(compute_dtype),          # (bneck_p, nx)
        "bu": bu.reshape(1, nx),                 # f32
    }


# ---------------------------------------------------------------------------
# pallas_call construction
# ---------------------------------------------------------------------------
def _make_call(M, nx, bneck_p, tm, grid, x_dtype, eps, vmem_limit,
               single_buffer_weights):
    kernel = functools.partial(_adapter_kernel, eps=eps)

    const_kwargs = {}
    if single_buffer_weights:
        # Constant-index operands don't need double buffers.
        const_kwargs = dict(pipeline_mode=pl.Buffered(1))

    in_specs = [
        pl.BlockSpec((tm, nx), lambda i: (i, 0)),                        # x tile
        pl.BlockSpec((nx, bneck_p), lambda i: (0, 0), **const_kwargs),   # W_down'
        pl.BlockSpec((1, bneck_p), lambda i: (0, 0), **const_kwargs),    # b_down'
        pl.BlockSpec((bneck_p, nx), lambda i: (0, 0), **const_kwargs),   # W_up
        pl.BlockSpec((1, nx), lambda i: (0, 0), **const_kwargs),         # b_up
    ]

    return pl.pallas_call(
        kernel,
        out_shape=jax.ShapeDtypeStruct((M, nx), x_dtype),
        grid_spec=pl.GridSpec(
            grid=(grid,),
            in_specs=in_specs,
            out_specs=pl.BlockSpec((tm, nx), lambda i: (i, 0)),
        ),
        compiler_params=pltpu.CompilerParams(
            dimension_semantics=("parallel",),
            vmem_limit_bytes=vmem_limit),
    )


_BUFFERED_ONE_OK = None  # cached capability flag for pipeline_mode=Buffered(1)


def adapter_forward(x, prep, *, eps=1e-5, tm_target=1024):
    """Apply one Adapter (LN -> down -> ReLU -> up -> residual) via Pallas.

    x:    (batch, seq, n_embd) activations (f32 or bf16).
    prep: dict from prepare_adapter_params().
    """
    global _BUFFERED_ONE_OK

    B, S, nx = x.shape
    M = B * S
    wd, bd, wu, bu = prep["wd"], prep["bd"], prep["wu"], prep["bu"]
    bneck_p = wd.shape[1]

    vmem_limit, vmem_budget = _vmem_limits()
    x_itemsize = jnp.dtype(x.dtype).itemsize
    c_itemsize = jnp.dtype(wd.dtype).itemsize
    tm = _choose_tm(M, nx, bneck_p, x_itemsize, c_itemsize, tm_target,
                    vmem_budget)

    # Keep the (parallel) grid sharded across v7x's two TensorCores and the
    # pipeline busy: prefer >=8 steps when tiles stay large, always >=2 steps.
    if M >= 8 * 256:
        tm = min(tm, _round_up(_cdiv(M, 8), 8))
    elif M > 8:
        tm = min(tm, _round_up(_cdiv(M, 2), 8))
    grid = _cdiv(M, tm)

    # No row padding / slicing: the ragged last tile (if any) is handled by
    # Pallas' masked block reads / discarded OOB writes; rows are independent.
    x2d = x.reshape(M, nx)
    args = (x2d, wd, bd, wu, bu)

    if _BUFFERED_ONE_OK is not False:
        try:
            out2d = _make_call(M, nx, bneck_p, tm, grid, x.dtype, eps,
                               vmem_limit, True)(*args)
            _BUFFERED_ONE_OK = True
        except Exception:
            _BUFFERED_ONE_OK = False
            out2d = _make_call(M, nx, bneck_p, tm, grid, x.dtype, eps,
                               vmem_limit, False)(*args)
    else:
        out2d = _make_call(M, nx, bneck_p, tm, grid, x.dtype, eps,
                           vmem_limit, False)(*args)

    return out2d.reshape(B, S, nx)


# ---------------------------------------------------------------------------
# MixAdapter
# ---------------------------------------------------------------------------
def init_mix_adapter_params(key, n_embd, bottleneck, adapter_num):
    """Deterministic synthetic parameters for `adapter_num` Adapters
    (PyTorch-faithful layout: LN gamma/beta, Linear weights stored (in, out))."""
    adapters = []
    for a in range(adapter_num):
        k = jax.random.fold_in(key, a)
        k_d, k_u, k_g, k_b = jax.random.split(k, 4)
        adapters.append({
            "ln_g": 1.0 + 0.1 * jax.random.normal(k_g, (n_embd,), jnp.float32),
            "ln_b": 0.05 * jax.random.normal(k_b, (n_embd,), jnp.float32),
            "w_down": 0.02 * jax.random.normal(k_d, (n_embd, bottleneck),
                                               jnp.float32),
            "b_down": jnp.zeros((bottleneck,), jnp.float32),
            "w_up": 0.02 * jax.random.normal(k_u, (bottleneck, n_embd),
                                             jnp.float32),
            "b_up": jnp.zeros((n_embd,), jnp.float32),
        })
    return adapters


def mix_adapter_forward(x, prepared_adapters, task_id=-1, *, eps=1e-5, **kw):
    """MixAdapter.forward: identity if task_id == -1 else Adapter[task_id](x).
    task_id is a static Python int (as in the PyTorch module)."""
    # TODO(synk): for a traced task_id, stack prepared adapters into
    # (A, nx, bneck_p) arrays and select the slice via scalar prefetch.
    if task_id == -1:
        return x
    return adapter_forward(x, prepared_adapters[task_id], eps=eps, **kw)


# ---------------------------------------------------------------------------
# Pure-JAX reference (PyTorch-faithful, f32)
# ---------------------------------------------------------------------------
def _reference_adapter(x, p, eps=1e-5):
    xf = x.astype(jnp.float32)
    mean = jnp.mean(xf, axis=-1, keepdims=True)
    var = jnp.mean((xf - mean) ** 2, axis=-1, keepdims=True)
    xn = (xf - mean) / jnp.sqrt(var + eps) * p["ln_g"] + p["ln_b"]
    h = jnp.maximum(xn @ p["w_down"] + p["b_down"], 0.0)
    y = h @ p["w_up"] + p["b_up"]
    return (xf + y).astype(x.dtype)


if __name__ == "__main__":
    key = jax.random.PRNGKey(0)

    # Small shapes consistent with the module's forward:
    batch, seq, n_embd = 2, 8, 32
    bottleneck_size, adapter_num = 16, 3   # scaled-down from (400, 25)

    k_x, k_p = jax.random.split(key)
    x = jax.random.normal(k_x, (batch, seq, n_embd), jnp.float32)
    raw_params = init_mix_adapter_params(k_p, n_embd, bottleneck_size,
                                         adapter_num)

    # Prepared (folded / padded / cast) parameters, built once.
    prep_f32 = [prepare_adapter_params(p, jnp.float32) for p in raw_params]
    prep_bf16 = [prepare_adapter_params(p, jnp.bfloat16) for p in raw_params]

    # task_id == -1 -> identity path (plain JAX, no kernel needed).
    out_identity = mix_adapter_forward(x, prep_f32, task_id=-1)
    jax.block_until_ready(out_identity)
    assert jnp.array_equal(out_identity, x)

    task_id = 1
    ref = _reference_adapter(x, raw_params[task_id])

    # Exact-validation path: f32 MXU operands.
    out_f32 = mix_adapter_forward(x, prep_f32, task_id=task_id)
    jax.block_until_ready(out_f32)
    assert out_f32.shape == x.shape and out_f32.dtype == x.dtype
    assert jnp.allclose(out_f32, ref, atol=1e-5, rtol=1e-5), \
        "f32 path mismatch vs reference"

    # Default fast path: bf16 MXU operands with f32 accumulation.
    out_bf16 = mix_adapter_forward(x, prep_bf16, task_id=task_id)
    jax.block_until_ready(out_bf16)
    assert out_bf16.shape == x.shape and out_bf16.dtype == x.dtype
    assert jnp.allclose(out_bf16, ref, atol=5e-3, rtol=5e-3), \
        "bf16 path drifted too far from f32 reference"

    # bf16 activation I/O (halves HBM traffic; kernel keeps f32 LN/residual).
    out_bf16_io = mix_adapter_forward(x.astype(jnp.bfloat16), prep_bf16,
                                      task_id=task_id)
    jax.block_until_ready(out_bf16_io)
    assert out_bf16_io.dtype == jnp.bfloat16
    assert jnp.allclose(out_bf16_io.astype(jnp.float32), ref,
                        atol=3e-2, rtol=3e-2), \
        "bf16-I/O path drifted too far from f32 reference"

    print("KERNEL_OK")
</pallas_src>

<mosaic_0001>
module attributes {stable_mosaic.version = 11 : i64} {
  func.func @_adapter_kernel(%arg0: i32, %arg1: memref<8x32xf32, #tpu.memory_space<vmem>>, %arg2: memref<32x128xf32, #tpu.memory_space<vmem>>, %arg3: memref<1x128xf32, #tpu.memory_space<vmem>>, %arg4: memref<128x32xf32, #tpu.memory_space<vmem>>, %arg5: memref<1x32xf32, #tpu.memory_space<vmem>>, %arg6: memref<8x32xf32, #tpu.memory_space<vmem>>) attributes {dimension_semantics = [#tpu.dimension_semantics<parallel>], iteration_bounds = array<i64: 2>, scalar_prefetch = 0 : i64, scratch_operands = 0 : i64, tpu.core_type = #tpu.core_type<tc>, window_params = [{transform_indices = @transform_0, window_bounds = array<i64: 8, 32>}, {pipeline_mode = #tpu.pipeline_mode<synchronous>, transform_indices = @transform_1, window_bounds = array<i64: 32, 128>}, {pipeline_mode = #tpu.pipeline_mode<synchronous>, transform_indices = @transform_2, window_bounds = array<i64: 1, 128>}, {pipeline_mode = #tpu.pipeline_mode<synchronous>, transform_indices = @transform_3, window_bounds = array<i64: 128, 32>}, {pipeline_mode = #tpu.pipeline_mode<synchronous>, transform_indices = @transform_4, window_bounds = array<i64: 1, 32>}, {transform_indices = @transform_5, window_bounds = array<i64: 8, 32>}]} {
    %c0 = arith.constant 0 : index
    %c0_0 = arith.constant 0 : index
    %0 = vector.load %arg1[%c0, %c0_0] : memref<8x32xf32, #tpu.memory_space<vmem>>, vector<8x32xf32>
    %cst = arith.constant dense<0.000000e+00> : vector<8xf32>
    %1 = vector.multi_reduction <add>, %0, %cst [1] : vector<8x32xf32> to vector<8xf32>
    %2 = vector.shape_cast %1 : vector<8xf32> to vector<8x1xf32>
    %3 = arith.mulf %0, %0 : vector<8x32xf32>
    %cst_1 = arith.constant dense<0.000000e+00> : vector<8xf32>
    %4 = vector.multi_reduction <add>, %3, %cst_1 [1] : vector<8x32xf32> to vector<8xf32>
    %5 = vector.shape_cast %4 : vector<8xf32> to vector<8x1xf32>
    %cst_2 = arith.constant 3.125000e-02 : f32
    %6 = vector.broadcast %cst_2 : f32 to vector<8x1xf32>
    %7 = arith.mulf %2, %6 : vector<8x1xf32>
    %cst_3 = arith.constant 3.125000e-02 : f32
    %8 = vector.broadcast %cst_3 : f32 to vector<8x1xf32>
    %9 = arith.mulf %5, %8 : vector<8x1xf32>
    %10 = arith.mulf %7, %7 : vector<8x1xf32>
    %11 = arith.subf %9, %10 : vector<8x1xf32>
    %cst_4 = arith.constant 0.000000e+00 : f32
    %12 = vector.broadcast %cst_4 : f32 to vector<8x1xf32>
    %13 = arith.maximumf %11, %12 : vector<8x1xf32>
    %14 = vector.broadcast %7 : vector<8x1xf32> to vector<8x32xf32>
    %15 = arith.subf %0, %14 : vector<8x32xf32>
    %cst_5 = arith.constant 9.99999974E-6 : f32
    %16 = vector.broadcast %cst_5 : f32 to vector<8x1xf32>
    %17 = arith.addf %13, %16 : vector<8x1xf32>
    %18 = math.rsqrt %17 : vector<8x1xf32>
    %19 = vector.broadcast %18 : vector<8x1xf32> to vector<8x32xf32>
    %20 = arith.mulf %15, %19 : vector<8x32xf32>
    %c0_6 = arith.constant 0 : index
    %c0_7 = arith.constant 0 : index
    %21 = vector.load %arg2[%c0_6, %c0_7] : memref<32x128xf32, #tpu.memory_space<vmem>>, vector<32x128xf32>
    %cst_8 = arith.constant dense<0.000000e+00> : vector<8x128xf32>
    %22 = tpu.matmul %20, %21, %cst_8 {dimension_numbers = #tpu.dot_dimension_numbers<[1], [0], [0], [1], [0, 0, 1, 1], [], []>} : vector<8x32xf32>, vector<32x128xf32>, vector<8x128xf32> -> vector<8x128xf32>
    %c0_9 = arith.constant 0 : index
    %c0_10 = arith.constant 0 : index
    %23 = vector.load %arg3[%c0_9, %c0_10] : memref<1x128xf32, #tpu.memory_space<vmem>>, vector<1x128xf32>
    %24 = vector.broadcast %23 : vector<1x128xf32> to vector<8x128xf32>
    %25 = arith.addf %22, %24 : vector<8x128xf32>
    %cst_11 = arith.constant 0.000000e+00 : f32
    %26 = vector.broadcast %cst_11 : f32 to vector<8x128xf32>
    %27 = arith.maximumf %25, %26 : vector<8x128xf32>
    %c0_12 = arith.constant 0 : index
    %c0_13 = arith.constant 0 : index
    %28 = vector.load %arg4[%c0_12, %c0_13] : memref<128x32xf32, #tpu.memory_space<vmem>>, vector<128x32xf32>
    %cst_14 = arith.constant dense<0.000000e+00> : vector<8x32xf32>
    %29 = tpu.matmul %27, %28, %cst_14 {dimension_numbers = #tpu.dot_dimension_numbers<[1], [0], [0], [1], [0, 0, 1, 1], [], []>} : vector<8x128xf32>, vector<128x32xf32>, vector<8x32xf32> -> vector<8x32xf32>
    %c0_15 = arith.constant 0 : index
    %c0_16 = arith.constant 0 : index
    %30 = vector.load %arg5[%c0_15, %c0_16] : memref<1x32xf32, #tpu.memory_space<vmem>>, vector<1x32xf32>
    %31 = vector.broadcast %30 : vector<1x32xf32> to vector<8x32xf32>
    %32 = arith.addf %29, %31 : vector<8x32xf32>
    %c0_17 = arith.constant 0 : index
    %c0_18 = arith.constant 0 : index
    %33 = vector.load %arg1[%c0_17, %c0_18] : memref<8x32xf32, #tpu.memory_space<vmem>>, vector<8x32xf32>
    %34 = arith.addf %33, %32 : vector<8x32xf32>
    %c0_19 = arith.constant 0 : index
    %c0_20 = arith.constant 0 : index
    %35 = vector.load %arg6[%c0_19, %c0_20] : memref<8x32xf32, #tpu.memory_space<vmem>>, vector<8x32xf32>
    tpu.vector_store %arg6[%c0_19, %c0_20], %34 {strides = array<i32>} : memref<8x32xf32, #tpu.memory_space<vmem>>, vector<8x32xf32>,
    return
  }
  func.func @transform_0(%arg0: i32) -> (i32, i32) {
    %c0_i32 = arith.constant 0 : i32
    %c0_i32_0 = arith.constant 0 : i32
    return %arg0, %c0_i32 : i32, i32
  }
  func.func @transform_1(%arg0: i32) -> (i32, i32) {
    %c0_i32 = arith.constant 0 : i32
    %c0_i32_0 = arith.constant 0 : i32
    %c0_i32_1 = arith.constant 0 : i32
    return %c0_i32, %c0_i32_0 : i32, i32
  }
  func.func @transform_2(%arg0: i32) -> (i32, i32) {
    %c0_i32 = arith.constant 0 : i32
    %c0_i32_0 = arith.constant 0 : i32
    %c0_i32_1 = arith.constant 0 : i32
    return %c0_i32, %c0_i32_0 : i32, i32
  }
  func.func @transform_3(%arg0: i32) -> (i32, i32) {
    %c0_i32 = arith.constant 0 : i32
    %c0_i32_0 = arith.constant 0 : i32
    %c0_i32_1 = arith.constant 0 : i32
    return %c0_i32, %c0_i32_0 : i32, i32
  }
  func.func @transform_4(%arg0: i32) -> (i32, i32) {
    %c0_i32 = arith.constant 0 : i32
    %c0_i32_0 = arith.constant 0 : i32
    %c0_i32_1 = arith.constant 0 : i32
    return %c0_i32, %c0_i32_0 : i32, i32
  }
  func.func @transform_5(%arg0: i32) -> (i32, i32) {
    %c0_i32 = arith.constant 0 : i32
    %c0_i32_0 = arith.constant 0 : i32
    return %arg0, %c0_i32 : i32, i32
  }
}

module attributes {stable_mosaic.version = 11 : i64} {
  func.func @_adapter_kernel(%arg0: i32, %arg1: memref<8x32xf32, #tpu.memory_space<vmem>>, %arg2: memref<32x128xf32, #tpu.memory_space<vmem>>, %arg3: memref<1x128xf32, #tpu.memory_space<vmem>>, %arg4: memref<128x32xf32, #tpu.memory_space<vmem>>, %arg5: memref<1x32xf32, #tpu.memory_space<vmem>>, %arg6: memref<8x32xf32, #tpu.memory_space<vmem>>) attributes {dimension_semantics = [#tpu.dimension_semantics<parallel>], iteration_bounds = array<i64: 2>, scalar_prefetch = 0 : i64, scratch_operands = 0 : i64, tpu.core_type = #tpu.core_type<tc>, window_params = [{transform_indices = @transform_0, window_bounds = array<i64: 8, 32>}, {pipeline_mode = #tpu.pipeline_mode<synchronous>, transform_indices = @transform_1, window_bounds = array<i64: 32, 128>}, {pipeline_mode = #tpu.pipeline_mode<synchronous>, transform_indices = @transform_2, window_bounds = array<i64: 1, 128>}, {pipeline_mode = #tpu.pipeline_mode<synchronous>, transform_indices = @transform_3, window_bounds = array<i64: 128, 32>}, {pipeline_mode = #tpu.pipeline_mode<synchronous>, transform_indices = @transform_4, window_bounds = array<i64: 1, 32>}, {transform_indices = @transform_5, window_bounds = array<i64: 8, 32>}]} {
    %c0 = arith.constant 0 : index
    %c0_0 = arith.constant 0 : index
    %0 = vector.load %arg1[%c0, %c0_0] : memref<8x32xf32, #tpu.memory_space<vmem>>, vector<8x32xf32>
    %cst = arith.constant dense<0.000000e+00> : vector<8xf32>
    %1 = vector.multi_reduction <add>, %0, %cst [1] : vector<8x32xf32> to vector<8xf32>
    %2 = vector.shape_cast %1 : vector<8xf32> to vector<8x1xf32>
    %3 = arith.mulf %0, %0 : vector<8x32xf32>
    %cst_1 = arith.constant dense<0.000000e+00> : vector<8xf32>
    %4 = vector.multi_reduction <add>, %3, %cst_1 [1] : vector<8x32xf32> to vector<8xf32>
    %5 = vector.shape_cast %4 : vector<8xf32> to vector<8x1xf32>
    %cst_2 = arith.constant 3.125000e-02 : f32
    %6 = vector.broadcast %cst_2 : f32 to vector<8x1xf32>
    %7 = arith.mulf %2, %6 : vector<8x1xf32>
    %cst_3 = arith.constant 3.125000e-02 : f32
    %8 = vector.broadcast %cst_3 : f32 to vector<8x1xf32>
    %9 = arith.mulf %5, %8 : vector<8x1xf32>
    %10 = arith.mulf %7, %7 : vector<8x1xf32>
    %11 = arith.subf %9, %10 : vector<8x1xf32>
    %cst_4 = arith.constant 0.000000e+00 : f32
    %12 = vector.broadcast %cst_4 : f32 to vector<8x1xf32>
    %13 = arith.maximumf %11, %12 : vector<8x1xf32>
    %14 = vector.broadcast %7 : vector<8x1xf32> to vector<8x32xf32>
    %15 = arith.subf %0, %14 : vector<8x32xf32>
    %cst_5 = arith.constant 9.99999974E-6 : f32
    %16 = vector.broadcast %cst_5 : f32 to vector<8x1xf32>
    %17 = arith.addf %13, %16 : vector<8x1xf32>
    %18 = math.rsqrt %17 : vector<8x1xf32>
    %19 = vector.broadcast %18 : vector<8x1xf32> to vector<8x32xf32>
    %20 = arith.mulf %15, %19 : vector<8x32xf32>
    %c0_6 = arith.constant 0 : index
    %c0_7 = arith.constant 0 : index
    %21 = vector.load %arg2[%c0_6, %c0_7] : memref<32x128xf32, #tpu.memory_space<vmem>>, vector<32x128xf32>
    %cst_8 = arith.constant dense<0.000000e+00> : vector<8x128xf32>
    %22 = tpu.matmul %20, %21, %cst_8 {dimension_numbers = #tpu.dot_dimension_numbers<[1], [0], [0], [1], [0, 0, 1, 1], [], []>} : vector<8x32xf32>, vector<32x128xf32>, vector<8x128xf32> -> vector<8x128xf32>
    %c0_9 = arith.constant 0 : index
    %c0_10 = arith.constant 0 : index
    %23 = vector.load %arg3[%c0_9, %c0_10] : memref<1x128xf32, #tpu.memory_space<vmem>>, vector<1x128xf32>
    %24 = vector.broadcast %23 : vector<1x128xf32> to vector<8x128xf32>
    %25 = arith.addf %22, %24 : vector<8x128xf32>
    %cst_11 = arith.constant 0.000000e+00 : f32
    %26 = vector.broadcast %cst_11 : f32 to vector<8x128xf32>
    %27 = arith.maximumf %25, %26 : vector<8x128xf32>
    %c0_12 = arith.constant 0 : index
    %c0_13 = arith.constant 0 : index
    %28 = vector.load %arg4[%c0_12, %c0_13] : memref<128x32xf32, #tpu.memory_space<vmem>>, vector<128x32xf32>
    %cst_14 = arith.constant dense<0.000000e+00> : vector<8x32xf32>
    %29 = tpu.matmul %27, %28, %cst_14 {dimension_numbers = #tpu.dot_dimension_numbers<[1], [0], [0], [1], [0, 0, 1, 1], [], []>} : vector<8x128xf32>, vector<128x32xf32>, vector<8x32xf32> -> vector<8x32xf32>
    %c0_15 = arith.constant 0 : index
    %c0_16 = arith.constant 0 : index
    %30 = vector.load %arg5[%c0_15, %c0_16] : memref<1x32xf32, #tpu.memory_space<vmem>>, vector<1x32xf32>
    %31 = vector.broadcast %30 : vector<1x32xf32> to vector<8x32xf32>
    %32 = arith.addf %29, %31 : vector<8x32xf32>
    %c0_17 = arith.constant 0 : index
    %c0_18 = arith.constant 0 : index
    %33 = vector.load %arg1[%c0_17, %c0_18] : memref<8x32xf32, #tpu.memory_space<vmem>>, vector<8x32xf32>
    %34 = arith.addf %33, %32 : vector<8x32xf32>
    %c0_19 = arith.constant 0 : index
    %c0_20 = arith.constant 0 : index
    %35 = vector.load %arg6[%c0_19, %c0_20] : memref<8x32xf32, #tpu.memory_space<vmem>>, vector<8x32xf32>
    tpu.vector_store %arg6[%c0_19, %c0_20], %34 {strides = array<i32>} : memref<8x32xf32, #tpu.memory_space<vmem>>, vector<8x32xf32>,
    return
  }
  func.func @transform_0(%arg0: i32) -> (i32, i32) {
    %c0_i32 = arith.constant 0 : i32
    %c0_i32_0 = arith.constant 0 : i32
    return %arg0, %c0_i32 : i32, i32
  }
  func.func @transform_1(%arg0: i32) -> (i32, i32) {
    %c0_i32 = arith.constant 0 : i32
    %c0_i32_0 = arith.constant 0 : i32
    %c0_i32_1 = arith.constant 0 : i32
    return %c0_i32, %c0_i32_0 : i32, i32
  }
  func.func @transform_2(%arg0: i32) -> (i32, i32) {
    %c0_i32 = arith.constant 0 : i32
    %c0_i32_0 = arith.constant 0 : i32
    %c0_i32_1 = arith.constant 0 : i32
    return %c0_i32, %c0_i32_0 : i32, i32
  }
  func.func @transform_3(%arg0: i32) -> (i32, i32) {
    %c0_i32 = arith.constant 0 : i32
    %c0_i32_0 = arith.constant 0 : i32
    %c0_i32_1 = arith.constant 0 : i32
    return %c0_i32, %c0_i32_0 : i32, i32
  }
  func.func @transform_4(%arg0: i32) -> (i32, i32) {
    %c0_i32 = arith.constant 0 : i32
    %c0_i32_0 = arith.constant 0 : i32
    %c0_i32_1 = arith.constant 0 : i32
    return %c0_i32, %c0_i32_0 : i32, i32
  }
  func.func @transform_5(%arg0: i32) -> (i32, i32) {
    %c0_i32 = arith.constant 0 : i32
    %c0_i32_0 = arith.constant 0 : i32
    return %arg0, %c0_i32 : i32, i32
  }
}

</mosaic_0001>

<llo_original>
// kernel: tpu_custom_call.1
$region0: #{tpu_custom_call.1}
  #allocation0 [shape = 'u32[]', space=smem, size = 0x4, offset = 0x4, fixed_abs, tag = 'smem constant byte address 0x4 - core index']
  #allocation1 [shape = 'u32[72,128]{1,0:T(1,128)}', space=vmem, size = 0x9000, scoped, tag = 'internal scratch']
  %s0 = inlined_call_operand.vmem [shape: f32[16,32], index: 0, kind: input, shape index: {}]
  %s1 = inlined_call_operand.vmem [shape: f32[32,128], index: 1, kind: input, shape index: {}]
  %s2 = inlined_call_operand.vmem [shape: f32[1,128], index: 2, kind: input, shape index: {}]
  %s3 = inlined_call_operand.vmem [shape: f32[128,32], index: 3, kind: input, shape index: {}]
  %s4 = inlined_call_operand.vmem [shape: f32[1,32], index: 4, kind: input, shape index: {}]
  %s5 = inlined_call_operand.hbm [shape: f32[16,32], index: 5, kind: output, shape index: {}]
  %s6 = sld [smem:[#allocation0]]
  $region53: #{tpu_custom_call.1} parent=0
    _
  %s8 = ssub.s32 1, %s6
  %s9 = scalar_select 0, %s8, %s6
  $region1: #{tpu_custom_call.1} parent=0
    #allocation2 [shape = 'u8[8192]{0}', space=vmem, size = 0x2000, scoped, tag = 'output window, operand 0']
    #allocation3 [shape = 's32[2]{0}', space=sflag, size = 0x8, scoped, tag = 'scoped memory for tpu_custom_call.1']
    %10 = vsyncpa [#allocation3], 0
    %s11 = scalar_lea.sflag [#allocation3], 1
    %12 = vsyncpa %s11, 0
    loop: start=0, step=1, limit=4
    $region2: #{tpu_custom_call.1} parent=1 // loop_pre_header
      _
    $region3: #{tpu_custom_call.1} parent=1 // loop_header
      %s14 = sphi 0, %s18
      %p15 = scmp.ge.s32.totalorder %s14, 4
      %s24 = sphi 0, %s26
      %s27 = sphi 0, %s24
      %s28 = sphi 0, %s27
      %s44 = sphi 0, %s28
      %s48 = sphi 0, %s48
      %s50 = sphi 0, %s48
      %s51 = sphi 0, %s50
      %s65 = sphi 0, %s51
      %s69 = sphi 0, %s69
      %s71 = sphi 0, %s69
      %s72 = sphi 0, %s71
      %s86 = sphi 0, %s72
      %s90 = sphi 0, %s90
      %s92 = sphi 0, %s90
      %s93 = sphi 0, %s92
      %s107 = sphi 0, %s93
      %s111 = sphi 0, %s111
      %s113 = sphi 0, %s111
      %s114 = sphi 0, %s113
      %s128 = sphi 0, %s114
      %s134 = sphi 0, %s136
      %s137 = sphi 0, %s134
      %s138 = sphi 0, %s137
      %s154 = sphi 0, %s138
    $region4: #{tpu_custom_call.1} parent=1 // loop_header_branch
      %17 = sbr.rel (%p15) target = $region8
    $region5: #{tpu_custom_call.1} parent=1 // loop_body
      %s19 = ssub.s32 %s14, 1
      %s20 = ssub.s32 %s14, 2
      %s21 = sadd.s32 %s14, 1
      %s22 = ssub.s32 %s14, %s21
      %p23 = scmp.eq.s32.totalorder %s22, 0
      %s25 = sadd.s32 %s24, 1
      %s26 = scalar_select %p23, %s24, %s25
      %p29 = pneg %p23
      %p30 = scmp.eq.s32.totalorder %s14, 1
      %p31 = por %p29, %p30
      %p32 = scmp.ne.s32.totalorder %s24, %s27
      %p33 = scmp.eq.s32.totalorder %s14, 0
      %p34 = por %p32, %p33
      %p35 = scmp.ne.s32.totalorder %s24, %s27
      %p36 = scmp.eq.s32.totalorder %s19, 1
      %p37 = por %p35, %p36
      %p38 = scmp.ne.s32.totalorder %s27, %s28
      %p39 = scmp.eq.s32.totalorder %s19, 0
      %p40 = por %p38, %p39
      %p41 = scmp.ne.s32.totalorder %s27, %s28
      %p42 = scmp.eq.s32.totalorder %s20, 1
      %p43 = por %p41, %p42
      %p45 = scmp.ne.s32.totalorder %s28, %s44
      %p46 = scmp.eq.s32.totalorder %s20, 0
      %p47 = por %p45, %p46
      %s49 = sadd.s32 %s48, 1
      %p52 = scmp.eq.s32.totalorder %s14, 1
      %p53 = scmp.ne.s32.totalorder %s48, %s50
      %p54 = scmp.eq.s32.totalorder %s14, 0
      %p55 = por %p53, %p54
      %p56 = scmp.ne.s32.totalorder %s48, %s50
      %p57 = scmp.eq.s32.totalorder %s19, 1
      %p58 = por %p56, %p57
      %p59 = scmp.ne.s32.totalorder %s50, %s51
      %p60 = scmp.eq.s32.totalorder %s19, 0
      %p61 = por %p59, %p60
      %p62 = scmp.ne.s32.totalorder %s50, %s51
      %p63 = scmp.eq.s32.totalorder %s20, 1
      %p64 = por %p62, %p63
      %p66 = scmp.ne.s32.totalorder %s51, %s65
      %p67 = scmp.eq.s32.totalorder %s20, 0
      %p68 = por %p66, %p67
      %s70 = sadd.s32 %s69, 1
      %p73 = scmp.eq.s32.totalorder %s14, 1
      %p74 = scmp.ne.s32.totalorder %s69, %s71
      %p75 = scmp.eq.s32.totalorder %s14, 0
      %p76 = por %p74, %p75
      %p77 = scmp.ne.s32.totalorder %s69, %s71
      %p78 = scmp.eq.s32.totalorder %s19, 1
      %p79 = por %p77, %p78
      %p80 = scmp.ne.s32.totalorder %s71, %s72
      %p81 = scmp.eq.s32.totalorder %s19, 0
      %p82 = por %p80, %p81
      %p83 = scmp.ne.s32.totalorder %s71, %s72
      %p84 = scmp.eq.s32.totalorder %s20, 1
      %p85 = por %p83, %p84
      %p87 = scmp.ne.s32.totalorder %s72, %s86
      %p88 = scmp.eq.s32.totalorder %s20, 0
      %p89 = por %p87, %p88
      %s91 = sadd.s32 %s90, 1
      %p94 = scmp.eq.s32.totalorder %s14, 1
      %p95 = scmp.ne.s32.totalorder %s90, %s92
      %p96 = scmp.eq.s32.totalorder %s14, 0
      %p97 = por %p95, %p96
      %p98 = scmp.ne.s32.totalorder %s90, %s92
      %p99 = scmp.eq.s32.totalorder %s19, 1
      %p100 = por %p98, %p99
      %p101 = scmp.ne.s32.totalorder %s92, %s93
      %p102 = scmp.eq.s32.totalorder %s19, 0
      %p103 = por %p101, %p102
      %p104 = scmp.ne.s32.totalorder %s92, %s93
      %p105 = scmp.eq.s32.totalorder %s20, 1
      %p106 = por %p104, %p105
      %p108 = scmp.ne.s32.totalorder %s93, %s107
      %p109 = scmp.eq.s32.totalorder %s20, 0
      %p110 = por %p108, %p109
      %s112 = sadd.s32 %s111, 1
      %p115 = scmp.eq.s32.totalorder %s14, 1
      %p116 = scmp.ne.s32.totalorder %s111, %s113
      %p117 = scmp.eq.s32.totalorder %s14, 0
      %p118 = por %p116, %p117
      %p119 = scmp.ne.s32.totalorder %s111, %s113
      %p120 = scmp.eq.s32.totalorder %s19, 1
      %p121 = por %p119, %p120
      %p122 = scmp.ne.s32.totalorder %s113, %s114
      %p123 = scmp.eq.s32.totalorder %s19, 0
      %p124 = por %p122, %p123
      %p125 = scmp.ne.s32.totalorder %s113, %s114
      %p126 = scmp.eq.s32.totalorder %s20, 1
      %p127 = por %p125, %p126
      %p129 = scmp.ne.s32.totalorder %s114, %s128
      %p130 = scmp.eq.s32.totalorder %s20, 0
      %p131 = por %p129, %p130
      %s132 = ssub.s32 %s14, %s21
      %p133 = scmp.eq.s32.totalorder %s132, 0
      %s135 = sadd.s32 %s134, 1
      %s136 = scalar_select %p133, %s134, %s135
      %p139 = pneg %p133
      %p140 = scmp.eq.s32.totalorder %s14, 1
      %p141 = por %p139, %p140
      %p142 = scmp.ne.s32.totalorder %s134, %s137
      %p143 = scmp.eq.s32.totalorder %s14, 0
      %p144 = por %p142, %p143
      %p145 = scmp.ne.s32.totalorder %s134, %s137
      %p146 = scmp.eq.s32.totalorder %s19, 1
      %p147 = por %p145, %p146
      %p148 = scmp.ne.s32.totalorder %s137, %s138
      %p149 = scmp.eq.s32.totalorder %s19, 0
      %p150 = por %p148, %p149
      %p151 = scmp.ne.s32.totalorder %s137, %s138
      %p152 = scmp.eq.s32.totalorder %s20, 1
      %p153 = por %p151, %p152
      %p155 = scmp.ne.s32.totalorder %s138, %s154
      %p156 = scmp.eq.s32.totalorder %s20, 0
      %p157 = por %p155, %p156
      %p158 = scmp.le.s32.totalorder 1, %s14
      %p159 = scmp.lt.s32.totalorder %s14, 3
      %p160 = pnand %p158, %p159
      %p161 = pneg %p160
      // Predicated region
      $region9: #{tpu_custom_call.1} parent=5 // pred_check
        _
      $region10: #{tpu_custom_call.1} parent=5 // pred_check_branch
        %163 = sbr.rel (%p160) target = $region12
      $region11: #{tpu_custom_call.1} parent=5 // pred_region
        %s164 = ssub.s32 %s14, 1
        // Predicated region
        $region13: #{tpu_custom_call.1} parent=11 // pred_check
          %p165 = pneg %p61
        $region14: #{tpu_custom_call.1} parent=11 // pred_check_branch
          %167 = sbr.rel (%p165) target = $region16
        $region15: #{tpu_custom_call.1} parent=11 // pred_region
          _
        $region16: #{tpu_custom_call.1} parent=11 // pred_fallthru
          _
        // Predicated region
        $region17: #{tpu_custom_call.1} parent=11 // pred_check
          %p168 = pneg %p82
        $region18: #{tpu_custom_call.1} parent=11 // pred_check_branch
          %170 = sbr.rel (%p168) target = $region20
        $region19: #{tpu_custom_call.1} parent=11 // pred_region
          _
        $region20: #{tpu_custom_call.1} parent=11 // pred_fallthru
          _
        // Predicated region
        $region21: #{tpu_custom_call.1} parent=11 // pred_check
          %p171 = pneg %p103
        $region22: #{tpu_custom_call.1} parent=11 // pred_check_branch
          %173 = sbr.rel (%p171) target = $region24
        $region23: #{tpu_custom_call.1} parent=11 // pred_region
          _
        $region24: #{tpu_custom_call.1} parent=11 // pred_fallthru
          _
        // Predicated region
        $region25: #{tpu_custom_call.1} parent=11 // pred_check
          %p174 = pneg %p124
        $region26: #{tpu_custom_call.1} parent=11 // pred_check_branch
          %176 = sbr.rel (%p174) target = $region28
        $region27: #{tpu_custom_call.1} parent=11 // pred_region
          _
        $region28: #{tpu_custom_call.1} parent=11 // pred_fallthru
          _
      $region12: #{tpu_custom_call.1} parent=5 // pred_fallthru
        _
      %p177 = scmp.lt.s32.totalorder %s14, 2
      // Predicated region
      $region29: #{tpu_custom_call.1} parent=5 // pred_check
        %p178 = pneg %p177
      $region30: #{tpu_custom_call.1} parent=5 // pred_check_branch
        %180 = sbr.rel (%p178) target = $region32
      $region31: #{tpu_custom_call.1} parent=5 // pred_region
        // Predicated region
        $region33: #{tpu_custom_call.1} parent=31 // pred_check
          %p181 = pneg %p34
        $region34: #{tpu_custom_call.1} parent=31 // pred_check_branch
          %183 = sbr.rel (%p181) target = $region36
        $region35: #{tpu_custom_call.1} parent=31 // pred_region
          %p184 = scmp.lt.s32.totalorder %s14, 1
          %s185 = scalar_select %p184, %s14, 1
          %s186 = smul.addr %s185, 8
          %s187 = scalar_lea.vmem %s0, %s186
        $region36: #{tpu_custom_call.1} parent=31 // pred_fallthru
          _
      $region32: #{tpu_custom_call.1} parent=5 // pred_fallthru
        _
      %p188 = scmp.le.s32.totalorder 1, %s14
      %p189 = scmp.lt.s32.totalorder %s14, 3
      %p190 = pnand %p188, %p189
      %p191 = pneg %p190
      // Predicated region
      $region37: #{tpu_custom_call.1} parent=5 // pred_check
        _
      $region38: #{tpu_custom_call.1} parent=5 // pred_check_branch
        %193 = sbr.rel (%p190) target = $region40
      $region39: #{tpu_custom_call.1} parent=5 // pred_region
        %s194 = ssub.s32 %s14, 1
        %p195 = scmp.lt.s32.totalorder %s19, 1
        %s196 = scalar_select %p195, %s19, 1
        %s197 = smul.addr %s196, 8
        %s198 = scalar_lea.vmem %s0, %s197
        %p199 = pneg %p40
        %p200 = pneg %p37
        %p201 = pneg %p61
        %p202 = pneg %p58
        %p203 = pneg %p82
        %p204 = pneg %p79
        %p205 = pneg %p103
        %p206 = pneg %p100
        %p207 = pneg %p124
        %p208 = pneg %p121
        %p209 = pneg %p150
        %p210 = pneg %p147
        %s211 = sand.u32 %s137, 1
        %s212 = scalar_lea.sflag [#allocation3], %s211
        %s213 = sand.u32 %s137, 1
        %s214 = smul.addr %s213, 8
        %s215 = scalar_lea.vmem [#allocation2], %s214
        %p216 = scmp.lt.s32.totalorder %s19, 1
        %s217 = scalar_select %p216, %s19, 1
        %s218 = smul.addr %s217, 8
        %s219 = scalar_lea.vmem %s0, %s218
        %v220 = vld [vmem:[%s219] sm:$0xff]
        %vm221 = vcmask 261120
        %v222 = vsel %vm221, %v220, 0.0
        %223 = vadd.xlane.f32.xlu0 %v222
        %v224 = vpop.xlane.xlu0 %223
        %v225 = vmul.f32 %v220, %v220
        %v226 = vsel %vm221, %v225, 0.0
        %227 = vadd.xlane.f32.xlu0 %v226
        %v228 = vpop.xlane.xlu0 %227
        %v229 = vmul.f32 %v224, 0.03125
        %v230 = vmul.f32 %v228, 0.03125
        %v231 = vmul.f32 %v229, %v229
        %v232 = vsub.f32 %v230, %v231
        %v233 = vmax.f32 %v232, 0.0
        %v234 = vsub.f32 %v220, %v229
        %v235 = vadd.f32 %v233, 1e-05
        %v236 = vrsqrt.pop %v235
        %v237 = vmul.f32 %v236, %v235
        %v238 = vmul.f32 %v237, %v236
        %v239 = vmul.f32 0.5, %v238
        %v240 = vsub.f32 1.5, %v239
        %v241 = vmul.f32 %v236, %v240
        %vm242 = vweird.f32 %v235
        %vm243 = vweird.f32 %v236
        %vm244 = vmor %vm242, %vm243
        %v245 = vsel %vm244, %v236, %v241
        %v246 = vmul.f32 %v234, %v245
        %v247 = vld [vmem:[%s1] sm:$0xff]
        %v248 = vld [vmem:[%s1 + $0x8] sm:$0xff]
        %v249 = vld [vmem:[%s1 + $0x10] sm:$0xff]
        %v250 = vld [vmem:[%s1 + $0x18] sm:$0xff]
        %v251 = vld [vmem:[%s2] sm:$0x1]
        %v253 = vperm.slane %v251, 0
        %v256 = vsel %vm221, %v246, 0
        %258 = vmatpush.msra.mxu0 0.0
        %259 = vmatpush.msra.mxu0 0.0
        %260 = vmatpush.msra.mxu0 0.0
        %261 = vmatpush.msra.mxu0 0.0
        %262 = vmatpush.msra.mxu0 0.0
        %263 = vmatpush.msra.mxu0 0.0
        %264 = vmatpush.msra.mxu0 0.0
        %265 = vmatpush.msra.mxu0 0.0
        %266 = vmatpush.msra.mxu0 0.0
        %267 = vmatpush.msra.mxu0 0.0
        %268 = vmatpush.msra.mxu0 0.0
        %269 = vmatpush.msra.mxu0 0.0
        %270 = vmatpush.msra.mxu0 %v250
        %271 = vmatpush.msra.mxu0 %v249
        %272 = vmatpush.msra.mxu0 %v248
        %273 = vmatpush.msra.mxu0 %v247
        %274 = vmatmul.f32.gmra.mxu0 %v256
        %v275 = vpop.f32.mrf.mxu0
        %v276 = vadd.f32 %v253, %v275
        %277 = vdwg.mxu0
        %v278 = vmax.f32 %v276, 0.0
        %v279 = vld [vmem:[%s3] sm:$0xff]
        %v280 = vld [vmem:[%s3 + $0x8] sm:$0xff]
        %v281 = vld [vmem:[%s3 + $0x10] sm:$0xff]
        %v282 = vld [vmem:[%s3 + $0x18] sm:$0xff]
        %v283 = vld [vmem:[%s3 + $0x20] sm:$0xff]
        %v284 = vld [vmem:[%s3 + $0x28] sm:$0xff]
        %v285 = vld [vmem:[%s3 + $0x30] sm:$0xff]
        %v286 = vld [vmem:[%s3 + $0x38] sm:$0xff]
        %v287 = vld [vmem:[%s3 + $0x40] sm:$0xff]
        %v288 = vld [vmem:[%s3 + $0x48] sm:$0xff]
        %v289 = vld [vmem:[%s3 + $0x50] sm:$0xff]
        %v290 = vld [vmem:[%s3 + $0x58] sm:$0xff]
        %v291 = vld [vmem:[%s3 + $0x60] sm:$0xff]
        %v292 = vld [vmem:[%s3 + $0x68] sm:$0xff]
        %v293 = vld [vmem:[%s3 + $0x70] sm:$0xff]
        %v294 = vld [vmem:[%s3 + $0x78] sm:$0xff]
        %v295 = vld [vmem:[%s4] sm:$0x1]
        %v297 = vperm.slane %v295, 0
        %299 = vmatpush.msra.mxu0 %v294
        %300 = vmatpush.msra.mxu0 %v293
        %301 = vmatpush.msra.mxu0 %v292
        %302 = vmatpush.msra.mxu0 %v291
        %303 = vmatpush.msra.mxu0 %v290
        %304 = vmatpush.msra.mxu0 %v289
        %305 = vmatpush.msra.mxu0 %v288
        %306 = vmatpush.msra.mxu0 %v287
        %307 = vmatpush.msra.mxu0 %v286
        %308 = vmatpush.msra.mxu0 %v285
        %309 = vmatpush.msra.mxu0 %v284
        %310 = vmatpush.msra.mxu0 %v283
        %311 = vmatpush.msra.mxu0 %v282
        %312 = vmatpush.msra.mxu0 %v281
        %313 = vmatpush.msra.mxu0 %v280
        %314 = vmatpush.msra.mxu0 %v279
        %315 = vmatmul.f32.gmra.mxu0 %v278
        %v316 = vpop.f32.mrf.mxu0
        %v317 = vadd.f32 %v297, %v316
        %318 = vdwg.mxu0
        %v319 = vadd.f32 %v220, %v317
        %320 = vst.msk [vmem:[%s215] sm:$0xff] %vm221, %v319
        %s321 = sand.u32 %s137, 1
        %s322 = scalar_lea.sflag [#allocation3], %s321
        %s323 = sand.u32 %s137, 1
        %s324 = smul.addr %s323, 8
        %s325 = scalar_lea.vmem [#allocation2], %s324
        // Predicated region
        $region41: #{tpu_custom_call.1} parent=39 // pred_check
          %p326 = pneg %p147
        $region42: #{tpu_custom_call.1} parent=39 // pred_check_branch
          %328 = sbr.rel (%p326) target = $region44
        $region43: #{tpu_custom_call.1} parent=39 // pred_region
          %330 = vsyncadd %s322, 0
          %s331 = smul.addr %s19, 8
          %s332 = scalar_lea.hbm %s5, %s331
          %s334 = sshll.u32 %s325, 4
          %s335 = int_to_ptr.vmem [resolvable:$true] %s334
          %s336 = sshll.u32 %s332, 4
          %s337 = int_to_ptr.hbm [resolvable:$true] %s336
          %339 = dma.vmem_to_hbm [thread:$0]  %s335, 128, %s337, %s322
        $region44: #{tpu_custom_call.1} parent=39 // pred_fallthru
          _
      $region40: #{tpu_custom_call.1} parent=5 // pred_fallthru
        _
      %p340 = scmp.le.s32.totalorder 2, %s14
      // Predicated region
      $region45: #{tpu_custom_call.1} parent=5 // pred_check
        %p341 = pneg %p340
      $region46: #{tpu_custom_call.1} parent=5 // pred_check_branch
        %343 = sbr.rel (%p341) target = $region48
      $region47: #{tpu_custom_call.1} parent=5 // pred_region
        %s344 = ssub.s32 %s14, 2
        // Predicated region
        $region49: #{tpu_custom_call.1} parent=47 // pred_check
          %p345 = pneg %p153
        $region50: #{tpu_custom_call.1} parent=47 // pred_check_branch
          %347 = sbr.rel (%p345) target = $region52
        $region51: #{tpu_custom_call.1} parent=47 // pred_region
          %s348 = sand.u32 %s138, 1
          %s349 = scalar_lea.sflag [#allocation3], %s348
          %s350 = sand.u32 %s138, 1
          %s351 = smul.addr %s350, 8
          %s352 = scalar_lea.vmem [#allocation2], %s351
          %354 = dma.done %s349, 128
        $region52: #{tpu_custom_call.1} parent=47 // pred_fallthru
          _
      $region48: #{tpu_custom_call.1} parent=5 // pred_fallthru
        _
    $region6: #{tpu_custom_call.1} parent=1 // loop_footer
      %s18 = sadd.s32 1, %s14
    $region7: #{tpu_custom_call.1} parent=1 // loop_footer_branch
      %13 = sbr.rel target = $region3
    $region8: #{tpu_custom_call.1} parent=1 // loop_exit
      _
    %355 = vsyncpa [#allocation3], 1
    %s356 = scalar_lea.sflag [#allocation3], 1
    %357 = vsyncpa %s356, 1

// kernel: tpu_custom_call.1
$region0: #{tpu_custom_call.1}
  #allocation0 [shape = 'u32[]', space=smem, size = 0x4, offset = 0x4, fixed_abs, tag = 'smem constant byte address 0x4 - core index']
  #allocation1 [shape = 'u32[72,128]{1,0:T(1,128)}', space=vmem, size = 0x9000, scoped, tag = 'internal scratch']
  %s0 = inlined_call_operand.vmem [shape: f32[16,32], index: 0, kind: input, shape index: {}]
  %s1 = inlined_call_operand.vmem [shape: f32[32,128], index: 1, kind: input, shape index: {}]
  %s2 = inlined_call_operand.vmem [shape: f32[1,128], index: 2, kind: input, shape index: {}]
  %s3 = inlined_call_operand.vmem [shape: f32[128,32], index: 3, kind: input, shape index: {}]
  %s4 = inlined_call_operand.vmem [shape: f32[1,32], index: 4, kind: input, shape index: {}]
  %s5 = inlined_call_operand.hbm [shape: f32[16,32], index: 5, kind: output, shape index: {}]
  %s6 = sld [smem:[#allocation0]]
  $region53: #{tpu_custom_call.1} parent=0
    _
  %s8 = ssub.s32 1, %s6
  %s9 = scalar_select 0, %s8, %s6
  $region1: #{tpu_custom_call.1} parent=0
    #allocation2 [shape = 'u8[8192]{0}', space=vmem, size = 0x2000, scoped, tag = 'output window, operand 0']
    #allocation3 [shape = 's32[2]{0}', space=sflag, size = 0x8, scoped, tag = 'scoped memory for tpu_custom_call.1']
    %10 = vsyncpa [#allocation3], 0
    %s11 = scalar_lea.sflag [#allocation3], 1
    %12 = vsyncpa %s11, 0
    loop: start=0, step=1, limit=4
    $region2: #{tpu_custom_call.1} parent=1 // loop_pre_header
      _
    $region3: #{tpu_custom_call.1} parent=1 // loop_header
      %s14 = sphi 0, %s18
      %p15 = scmp.ge.s32.totalorder %s14, 4
      %s24 = sphi 0, %s26
      %s27 = sphi 0, %s24
      %s28 = sphi 0, %s27
      %s44 = sphi 0, %s28
      %s48 = sphi 0, %s48
      %s50 = sphi 0, %s48
      %s51 = sphi 0, %s50
      %s65 = sphi 0, %s51
      %s69 = sphi 0, %s69
      %s71 = sphi 0, %s69
      %s72 = sphi 0, %s71
      %s86 = sphi 0, %s72
      %s90 = sphi 0, %s90
      %s92 = sphi 0, %s90
      %s93 = sphi 0, %s92
      %s107 = sphi 0, %s93
      %s111 = sphi 0, %s111
      %s113 = sphi 0, %s111
      %s114 = sphi 0, %s113
      %s128 = sphi 0, %s114
      %s134 = sphi 0, %s136
      %s137 = sphi 0, %s134
      %s138 = sphi 0, %s137
      %s154 = sphi 0, %s138
    $region4: #{tpu_custom_call.1} parent=1 // loop_header_branch
      %17 = sbr.rel (%p15) target = $region8
    $region5: #{tpu_custom_call.1} parent=1 // loop_body
      %s19 = ssub.s32 %s14, 1
      %s20 = ssub.s32 %s14, 2
      %s21 = sadd.s32 %s14, 1
      %s22 = ssub.s32 %s14, %s21
      %p23 = scmp.eq.s32.totalorder %s22, 0
      %s25 = sadd.s32 %s24, 1
      %s26 = scalar_select %p23, %s24, %s25
      %p29 = pneg %p23
      %p30 = scmp.eq.s32.totalorder %s14, 1
      %p31 = por %p29, %p30
      %p32 = scmp.ne.s32.totalorder %s24, %s27
      %p33 = scmp.eq.s32.totalorder %s14, 0
      %p34 = por %p32, %p33
      %p35 = scmp.ne.s32.totalorder %s24, %s27
      %p36 = scmp.eq.s32.totalorder %s19, 1
      %p37 = por %p35, %p36
      %p38 = scmp.ne.s32.totalorder %s27, %s28
      %p39 = scmp.eq.s32.totalorder %s19, 0
      %p40 = por %p38, %p39
      %p41 = scmp.ne.s32.totalorder %s27, %s28
      %p42 = scmp.eq.s32.totalorder %s20, 1
      %p43 = por %p41, %p42
      %p45 = scmp.ne.s32.totalorder %s28, %s44
      %p46 = scmp.eq.s32.totalorder %s20, 0
      %p47 = por %p45, %p46
      %s49 = sadd.s32 %s48, 1
      %p52 = scmp.eq.s32.totalorder %s14, 1
      %p53 = scmp.ne.s32.totalorder %s48, %s50
      %p54 = scmp.eq.s32.totalorder %s14, 0
      %p55 = por %p53, %p54
      %p56 = scmp.ne.s32.totalorder %s48, %s50
      %p57 = scmp.eq.s32.totalorder %s19, 1
      %p58 = por %p56, %p57
      %p59 = scmp.ne.s32.totalorder %s50, %s51
      %p60 = scmp.eq.s32.totalorder %s19, 0
      %p61 = por %p59, %p60
      %p62 = scmp.ne.s32.totalorder %s50, %s51
      %p63 = scmp.eq.s32.totalorder %s20, 1
      %p64 = por %p62, %p63
      %p66 = scmp.ne.s32.totalorder %s51, %s65
      %p67 = scmp.eq.s32.totalorder %s20, 0
      %p68 = por %p66, %p67
      %s70 = sadd.s32 %s69, 1
      %p73 = scmp.eq.s32.totalorder %s14, 1
      %p74 = scmp.ne.s32.totalorder %s69, %s71
      %p75 = scmp.eq.s32.totalorder %s14, 0
      %p76 = por %p74, %p75
      %p77 = scmp.ne.s32.totalorder %s69, %s71
      %p78 = scmp.eq.s32.totalorder %s19, 1
      %p79 = por %p77, %p78
      %p80 = scmp.ne.s32.totalorder %s71, %s72
      %p81 = scmp.eq.s32.totalorder %s19, 0
      %p82 = por %p80, %p81
      %p83 = scmp.ne.s32.totalorder %s71, %s72
      %p84 = scmp.eq.s32.totalorder %s20, 1
      %p85 = por %p83, %p84
      %p87 = scmp.ne.s32.totalorder %s72, %s86
      %p88 = scmp.eq.s32.totalorder %s20, 0
      %p89 = por %p87, %p88
      %s91 = sadd.s32 %s90, 1
      %p94 = scmp.eq.s32.totalorder %s14, 1
      %p95 = scmp.ne.s32.totalorder %s90, %s92
      %p96 = scmp.eq.s32.totalorder %s14, 0
      %p97 = por %p95, %p96
      %p98 = scmp.ne.s32.totalorder %s90, %s92
      %p99 = scmp.eq.s32.totalorder %s19, 1
      %p100 = por %p98, %p99
      %p101 = scmp.ne.s32.totalorder %s92, %s93
      %p102 = scmp.eq.s32.totalorder %s19, 0
      %p103 = por %p101, %p102
      %p104 = scmp.ne.s32.totalorder %s92, %s93
      %p105 = scmp.eq.s32.totalorder %s20, 1
      %p106 = por %p104, %p105
      %p108 = scmp.ne.s32.totalorder %s93, %s107
      %p109 = scmp.eq.s32.totalorder %s20, 0
      %p110 = por %p108, %p109
      %s112 = sadd.s32 %s111, 1
      %p115 = scmp.eq.s32.totalorder %s14, 1
      %p116 = scmp.ne.s32.totalorder %s111, %s113
      %p117 = scmp.eq.s32.totalorder %s14, 0
      %p118 = por %p116, %p117
      %p119 = scmp.ne.s32.totalorder %s111, %s113
      %p120 = scmp.eq.s32.totalorder %s19, 1
      %p121 = por %p119, %p120
      %p122 = scmp.ne.s32.totalorder %s113, %s114
      %p123 = scmp.eq.s32.totalorder %s19, 0
      %p124 = por %p122, %p123
      %p125 = scmp.ne.s32.totalorder %s113, %s114
      %p126 = scmp.eq.s32.totalorder %s20, 1
      %p127 = por %p125, %p126
      %p129 = scmp.ne.s32.totalorder %s114, %s128
      %p130 = scmp.eq.s32.totalorder %s20, 0
      %p131 = por %p129, %p130
      %s132 = ssub.s32 %s14, %s21
      %p133 = scmp.eq.s32.totalorder %s132, 0
      %s135 = sadd.s32 %s134, 1
      %s136 = scalar_select %p133, %s134, %s135
      %p139 = pneg %p133
      %p140 = scmp.eq.s32.totalorder %s14, 1
      %p141 = por %p139, %p140
      %p142 = scmp.ne.s32.totalorder %s134, %s137
      %p143 = scmp.eq.s32.totalorder %s14, 0
      %p144 = por %p142, %p143
      %p145 = scmp.ne.s32.totalorder %s134, %s137
      %p146 = scmp.eq.s32.totalorder %s19, 1
      %p147 = por %p145, %p146
      %p148 = scmp.ne.s32.totalorder %s137, %s138
      %p149 = scmp.eq.s32.totalorder %s19, 0
      %p150 = por %p148, %p149
      %p151 = scmp.ne.s32.totalorder %s137, %s138
      %p152 = scmp.eq.s32.totalorder %s20, 1
      %p153 = por %p151, %p152
      %p155 = scmp.ne.s32.totalorder %s138, %s154
      %p156 = scmp.eq.s32.totalorder %s20, 0
      %p157 = por %p155, %p156
      %p158 = scmp.le.s32.totalorder 1, %s14
      %p159 = scmp.lt.s32.totalorder %s14, 3
      %p160 = pnand %p158, %p159
      %p161 = pneg %p160
      // Predicated region
      $region9: #{tpu_custom_call.1} parent=5 // pred_check
        _
      $region10: #{tpu_custom_call.1} parent=5 // pred_check_branch
        %163 = sbr.rel (%p160) target = $region12
      $region11: #{tpu_custom_call.1} parent=5 // pred_region
        %s164 = ssub.s32 %s14, 1
        // Predicated region
        $region13: #{tpu_custom_call.1} parent=11 // pred_check
          %p165 = pneg %p61
        $region14: #{tpu_custom_call.1} parent=11 // pred_check_branch
          %167 = sbr.rel (%p165) target = $region16
        $region15: #{tpu_custom_call.1} parent=11 // pred_region
          _
        $region16: #{tpu_custom_call.1} parent=11 // pred_fallthru
          _
        // Predicated region
        $region17: #{tpu_custom_call.1} parent=11 // pred_check
          %p168 = pneg %p82
        $region18: #{tpu_custom_call.1} parent=11 // pred_check_branch
          %170 = sbr.rel (%p168) target = $region20
        $region19: #{tpu_custom_call.1} parent=11 // pred_region
          _
        $region20: #{tpu_custom_call.1} parent=11 // pred_fallthru
          _
        // Predicated region
        $region21: #{tpu_custom_call.1} parent=11 // pred_check
          %p171 = pneg %p103
        $region22: #{tpu_custom_call.1} parent=11 // pred_check_branch
          %173 = sbr.rel (%p171) target = $region24
        $region23: #{tpu_custom_call.1} parent=11 // pred_region
          _
        $region24: #{tpu_custom_call.1} parent=11 // pred_fallthru
          _
        // Predicated region
        $region25: #{tpu_custom_call.1} parent=11 // pred_check
          %p174 = pneg %p124
        $region26: #{tpu_custom_call.1} parent=11 // pred_check_branch
          %176 = sbr.rel (%p174) target = $region28
        $region27: #{tpu_custom_call.1} parent=11 // pred_region
          _
        $region28: #{tpu_custom_call.1} parent=11 // pred_fallthru
          _
      $region12: #{tpu_custom_call.1} parent=5 // pred_fallthru
        _
      %p177 = scmp.lt.s32.totalorder %s14, 2
      // Predicated region
      $region29: #{tpu_custom_call.1} parent=5 // pred_check
        %p178 = pneg %p177
      $region30: #{tpu_custom_call.1} parent=5 // pred_check_branch
        %180 = sbr.rel (%p178) target = $region32
      $region31: #{tpu_custom_call.1} parent=5 // pred_region
        // Predicated region
        $region33: #{tpu_custom_call.1} parent=31 // pred_check
          %p181 = pneg %p34
        $region34: #{tpu_custom_call.1} parent=31 // pred_check_branch
          %183 = sbr.rel (%p181) target = $region36
        $region35: #{tpu_custom_call.1} parent=31 // pred_region
          %p184 = scmp.lt.s32.totalorder %s14, 1
          %s185 = scalar_select %p184, %s14, 1
          %s186 = smul.addr %s185, 8
          %s187 = scalar_lea.vmem %s0, %s186
        $region36: #{tpu_custom_call.1} parent=31 // pred_fallthru
          _
      $region32: #{tpu_custom_call.1} parent=5 // pred_fallthru
        _
      %p188 = scmp.le.s32.totalorder 1, %s14
      %p189 = scmp.lt.s32.totalorder %s14, 3
      %p190 = pnand %p188, %p189
      %p191 = pneg %p190
      // Predicated region
      $region37: #{tpu_custom_call.1} parent=5 // pred_check
        _
      $region38: #{tpu_custom_call.1} parent=5 // pred_check_branch
        %193 = sbr.rel (%p190) target = $region40
      $region39: #{tpu_custom_call.1} parent=5 // pred_region
        %s194 = ssub.s32 %s14, 1
        %p195 = scmp.lt.s32.totalorder %s19, 1
        %s196 = scalar_select %p195, %s19, 1
        %s197 = smul.addr %s196, 8
        %s198 = scalar_lea.vmem %s0, %s197
        %p199 = pneg %p40
        %p200 = pneg %p37
        %p201 = pneg %p61
        %p202 = pneg %p58
        %p203 = pneg %p82
        %p204 = pneg %p79
        %p205 = pneg %p103
        %p206 = pneg %p100
        %p207 = pneg %p124
        %p208 = pneg %p121
        %p209 = pneg %p150
        %p210 = pneg %p147
        %s211 = sand.u32 %s137, 1
        %s212 = scalar_lea.sflag [#allocation3], %s211
        %s213 = sand.u32 %s137, 1
        %s214 = smul.addr %s213, 8
        %s215 = scalar_lea.vmem [#allocation2], %s214
        %p216 = scmp.lt.s32.totalorder %s19, 1
        %s217 = scalar_select %p216, %s19, 1
        %s218 = smul.addr %s217, 8
        %s219 = scalar_lea.vmem %s0, %s218
        %v220 = vld [vmem:[%s219] sm:$0xff]
        %vm221 = vcmask 261120
        %v222 = vsel %vm221, %v220, 0.0
        %223 = vadd.xlane.f32.xlu0 %v222
        %v224 = vpop.xlane.xlu0 %223
        %v225 = vmul.f32 %v220, %v220
        %v226 = vsel %vm221, %v225, 0.0
        %227 = vadd.xlane.f32.xlu0 %v226
        %v228 = vpop.xlane.xlu0 %227
        %v229 = vmul.f32 %v224, 0.03125
        %v230 = vmul.f32 %v228, 0.03125
        %v231 = vmul.f32 %v229, %v229
        %v232 = vsub.f32 %v230, %v231
        %v233 = vmax.f32 %v232, 0.0
        %v234 = vsub.f32 %v220, %v229
        %v235 = vadd.f32 %v233, 1e-05
        %v236 = vrsqrt.pop %v235
        %v237 = vmul.f32 %v236, %v235
        %v238 = vmul.f32 %v237, %v236
        %v239 = vmul.f32 0.5, %v238
        %v240 = vsub.f32 1.5, %v239
        %v241 = vmul.f32 %v236, %v240
        %vm242 = vweird.f32 %v235
        %vm243 = vweird.f32 %v236
        %vm244 = vmor %vm242, %vm243
        %v245 = vsel %vm244, %v236, %v241
        %v246 = vmul.f32 %v234, %v245
        %v247 = vld [vmem:[%s1] sm:$0xff]
        %v248 = vld [vmem:[%s1 + $0x8] sm:$0xff]
        %v249 = vld [vmem:[%s1 + $0x10] sm:$0xff]
        %v250 = vld [vmem:[%s1 + $0x18] sm:$0xff]
        %v251 = vld [vmem:[%s2] sm:$0x1]
        %v253 = vperm.slane %v251, 0
        %v256 = vsel %vm221, %v246, 0
        %258 = vmatpush.msra.mxu0 0.0
        %259 = vmatpush.msra.mxu0 0.0
        %260 = vmatpush.msra.mxu0 0.0
        %261 = vmatpush.msra.mxu0 0.0
        %262 = vmatpush.msra.mxu0 0.0
        %263 = vmatpush.msra.mxu0 0.0
        %264 = vmatpush.msra.mxu0 0.0
        %265 = vmatpush.msra.mxu0 0.0
        %266 = vmatpush.msra.mxu0 0.0
        %267 = vmatpush.msra.mxu0 0.0
        %268 = vmatpush.msra.mxu0 0.0
        %269 = vmatpush.msra.mxu0 0.0
        %270 = vmatpush.msra.mxu0 %v250
        %271 = vmatpush.msra.mxu0 %v249
        %272 = vmatpush.msra.mxu0 %v248
        %273 = vmatpush.msra.mxu0 %v247
        %274 = vmatmul.f32.gmra.mxu0 %v256
        %v275 = vpop.f32.mrf.mxu0
        %v276 = vadd.f32 %v253, %v275
        %277 = vdwg.mxu0
        %v278 = vmax.f32 %v276, 0.0
        %v279 = vld [vmem:[%s3] sm:$0xff]
        %v280 = vld [vmem:[%s3 + $0x8] sm:$0xff]
        %v281 = vld [vmem:[%s3 + $0x10] sm:$0xff]
        %v282 = vld [vmem:[%s3 + $0x18] sm:$0xff]
        %v283 = vld [vmem:[%s3 + $0x20] sm:$0xff]
        %v284 = vld [vmem:[%s3 + $0x28] sm:$0xff]
        %v285 = vld [vmem:[%s3 + $0x30] sm:$0xff]
        %v286 = vld [vmem:[%s3 + $0x38] sm:$0xff]
        %v287 = vld [vmem:[%s3 + $0x40] sm:$0xff]
        %v288 = vld [vmem:[%s3 + $0x48] sm:$0xff]
        %v289 = vld [vmem:[%s3 + $0x50] sm:$0xff]
        %v290 = vld [vmem:[%s3 + $0x58] sm:$0xff]
        %v291 = vld [vmem:[%s3 + $0x60] sm:$0xff]
        %v292 = vld [vmem:[%s3 + $0x68] sm:$0xff]
        %v293 = vld [vmem:[%s3 + $0x70] sm:$0xff]
        %v294 = vld [vmem:[%s3 + $0x78] sm:$0xff]
        %v295 = vld [vmem:[%s4] sm:$0x1]
        %v297 = vperm.slane %v295, 0
        %299 = vmatpush.msra.mxu0 %v294
        %300 = vmatpush.msra.mxu0 %v293
        %301 = vmatpush.msra.mxu0 %v292
        %302 = vmatpush.msra.mxu0 %v291
        %303 = vmatpush.msra.mxu0 %v290
        %304 = vmatpush.msra.mxu0 %v289
        %305 = vmatpush.msra.mxu0 %v288
        %306 = vmatpush.msra.mxu0 %v287
        %307 = vmatpush.msra.mxu0 %v286
        %308 = vmatpush.msra.mxu0 %v285
        %309 = vmatpush.msra.mxu0 %v284
        %310 = vmatpush.msra.mxu0 %v283
        %311 = vmatpush.msra.mxu0 %v282
        %312 = vmatpush.msra.mxu0 %v281
        %313 = vmatpush.msra.mxu0 %v280
        %314 = vmatpush.msra.mxu0 %v279
        %315 = vmatmul.f32.gmra.mxu0 %v278
        %v316 = vpop.f32.mrf.mxu0
        %v317 = vadd.f32 %v297, %v316
        %318 = vdwg.mxu0
        %v319 = vadd.f32 %v220, %v317
        %320 = vst.msk [vmem:[%s215] sm:$0xff] %vm221, %v319
        %s321 = sand.u32 %s137, 1
        %s322 = scalar_lea.sflag [#allocation3], %s321
        %s323 = sand.u32 %s137, 1
        %s324 = smul.addr %s323, 8
        %s325 = scalar_lea.vmem [#allocation2], %s324
        // Predicated region
        $region41: #{tpu_custom_call.1} parent=39 // pred_check
          %p326 = pneg %p147
        $region42: #{tpu_custom_call.1} parent=39 // pred_check_branch
          %328 = sbr.rel (%p326) target = $region44
        $region43: #{tpu_custom_call.1} parent=39 // pred_region
          %330 = vsyncadd %s322, 0
          %s331 = smul.addr %s19, 8
          %s332 = scalar_lea.hbm %s5, %s331
          %s334 = sshll.u32 %s325, 4
          %s335 = int_to_ptr.vmem [resolvable:$true] %s334
          %s336 = sshll.u32 %s332, 4
          %s337 = int_to_ptr.hbm [resolvable:$true] %s336
          %339 = dma.vmem_to_hbm [thread:$0]  %s335, 128, %s337, %s322
        $region44: #{tpu_custom_call.1} parent=39 // pred_fallthru
          _
      $region40: #{tpu_custom_call.1} parent=5 // pred_fallthru
        _
      %p340 = scmp.le.s32.totalorder 2, %s14
      // Predicated region
      $region45: #{tpu_custom_call.1} parent=5 // pred_check
        %p341 = pneg %p340
      $region46: #{tpu_custom_call.1} parent=5 // pred_check_branch
        %343 = sbr.rel (%p341) target = $region48
      $region47: #{tpu_custom_call.1} parent=5 // pred_region
        %s344 = ssub.s32 %s14, 2
        // Predicated region
        $region49: #{tpu_custom_call.1} parent=47 // pred_check
          %p345 = pneg %p153
        $region50: #{tpu_custom_call.1} parent=47 // pred_check_branch
          %347 = sbr.rel (%p345) target = $region52
        $region51: #{tpu_custom_call.1} parent=47 // pred_region
          %s348 = sand.u32 %s138, 1
          %s349 = scalar_lea.sflag [#allocation3], %s348
          %s350 = sand.u32 %s138, 1
          %s351 = smul.addr %s350, 8
          %s352 = scalar_lea.vmem [#allocation2], %s351
          %354 = dma.done %s349, 128
        $region52: #{tpu_custom_call.1} parent=47 // pred_fallthru
          _
      $region48: #{tpu_custom_call.1} parent=5 // pred_fallthru
        _
    $region6: #{tpu_custom_call.1} parent=1 // loop_footer
      %s18 = sadd.s32 1, %s14
    $region7: #{tpu_custom_call.1} parent=1 // loop_footer_branch
      %13 = sbr.rel target = $region3
    $region8: #{tpu_custom_call.1} parent=1 // loop_exit
      _
    %355 = vsyncpa [#allocation3], 1
    %s356 = scalar_lea.sflag [#allocation3], 1
    %357 = vsyncpa %s356, 1

</llo_original>
